<compile_context>
chip_gen: v6e
topology: v6e:2x2x1
jax: 0.10.0
libtpu: 0.0.40
codegen_flags: <defaults>
</compile_context>

<pallas_src>
import jax
import jax.numpy as jnp
from jax import lax
from jax.experimental import pallas as pl
from jax.experimental.pallas import tpu as pltpu

# Standard Faster R-CNN cfg.TRAIN defaults used by the reference module.
RPN_NEGATIVE_OVERLAP = 0.3
RPN_POSITIVE_OVERLAP = 0.7
RPN_CLOBBER_POSITIVES = False
RPN_FG_FRACTION = 0.5
RPN_BATCHSIZE = 256
RPN_BBOX_INSIDE_WEIGHT = 1.0
RPN_POSITIVE_WEIGHT = -1.0
FEAT_STRIDE = 16.0

# Rows of the precomputed anchor-data slab (coordinate-major, anchors in lanes).
# 0..3: anchors*16 (x1,y1,x2,y2)   4: inside mask   5..7: zero padding (one sublane tile).
_ADAT_ROWS = 8


def _anchor_target_kernel(adat_ref, gt_ref, gtt_ref, lab_ref, tgt_ref):
    # adat_ref: (8, Np) f32 (constant across grid)
    # gt_ref:   (1, K, 4) f32 gt boxes           gtt_ref: (1, 4, K) f32 (coord-major copy)
    # lab_ref:  (1, 1, Np) f32 labels            tgt_ref: (1, 4, Np) f32 bbox targets
    sx1 = adat_ref[0:1, :]                     # (1, Np) scaled anchor coords
    sy1 = adat_ref[1:2, :]
    sx2 = adat_ref[2:3, :]
    sy2 = adat_ref[3:4, :]
    inside = adat_ref[4:5, :]                  # 1.0 if anchor is "inside" (valid)

    # Recompute anchor-derived quantities from the 4 coords as packed (2, Np) ops.
    s_lo = adat_ref[0:2, :]                    # (2, Np): sx1, sy1
    s_hi = adat_ref[2:4, :]                    # (2, Np): sx2, sy2
    an_wh = s_hi - s_lo + 1.0                  # (2, Np): an_w, an_h  (scaled units)
    an_w = an_wh[0:1, :]
    an_h = an_wh[1:2, :]
    an_area = an_w * an_h                      # (1, Np)
    an_zero = jnp.logical_and(an_w == 1.0, an_h == 1.0)     # zero-area (padding) anchors
    inv_stride = 1.0 / FEAT_STRIDE
    ex_wh = (an_wh - 1.0) * inv_stride + 1.0   # (2, Np): ex_w, ex_h   (raw anchor units)
    ex_c = s_lo * inv_stride + 0.5 * ex_wh     # (2, Np): ex_cx, ex_cy

    gt = gt_ref[0]                             # (K, 4)
    gx1 = gt[:, 0:1]                           # (K, 1)
    gy1 = gt[:, 1:2]
    gx2 = gt[:, 2:3]
    gy2 = gt[:, 3:4]

    # --- bbox_overlaps_batch2(anchors * 16, gt_boxes), built as (K, Np) ------------
    gt_w = gx2 - gx1 + 1.0                     # (K, 1)
    gt_h = gy2 - gy1 + 1.0
    gt_area = gt_w * gt_h
    gt_zero = jnp.logical_and(gt_w == 1.0, gt_h == 1.0)     # padded (all-zero) gt rows

    iw = jnp.maximum(jnp.minimum(sx2, gx2) - jnp.maximum(sx1, gx1) + 1.0, 0.0)  # (K, Np)
    ih = jnp.maximum(jnp.minimum(sy2, gy2) - jnp.maximum(sy1, gy1) + 1.0, 0.0)
    inter = iw * ih
    ua = an_area + gt_area - inter             # > 0 always
    # EUP approx reciprocal instead of a VALU divide (largest op on the (K,Np) chain).
    overlaps = inter * pl.reciprocal(ua, approx=True)
    overlaps = jnp.where(gt_zero, 0.0, overlaps)
    # Outside / padded / zero-area anchors -> -1 so they never win gt_max or keep.
    invalid = jnp.logical_or(an_zero, inside < 0.5)          # (1, Np)
    overlaps = jnp.where(invalid, -1.0, overlaps)

    # --- label assignment ------------------------------------------------------------
    max_ov = jnp.max(overlaps, axis=0, keepdims=True)        # (1, Np) per-anchor max
    gt_max = jnp.max(overlaps, axis=1, keepdims=True)        # (K, 1)  per-gt max
    gt_max = jnp.where(gt_max == 0.0, 1e-5, gt_max)
    keep = jnp.sum((overlaps == gt_max).astype(jnp.float32),
                   axis=0, keepdims=True)                    # (1, Np)

    # RPN_CLOBBER_POSITIVES is False -> negatives set first.
    labels = jnp.where(max_ov < RPN_NEGATIVE_OVERLAP, 0.0, -1.0)
    labels = jnp.where(keep > 0.0, 1.0, labels)
    labels = jnp.where(max_ov >= RPN_POSITIVE_OVERLAP, 1.0, labels)
    # _unmap(fill=-1) folded in: anchors outside the image (and lane padding) get -1.
    labels = jnp.where(inside > 0.5, labels, -1.0)
    lab_ref[0] = labels

    # --- gather matched gt via one-hot argmax, done as a single MXU matmul ------------
    kidx = lax.broadcasted_iota(jnp.int32, overlaps.shape, 0)                # (K, Np)
    amax = jnp.min(jnp.where(overlaps == max_ov, kidx, jnp.int32(overlaps.shape[0])),
                   axis=0, keepdims=True)                                    # (1, Np)
    onehot = (kidx == amax).astype(jnp.float32)                              # (K, Np)
    # gtt_ref[0] is (4, K) coord-major gt; matched rows = mx1, my1, mx2, my2.
    matched = jnp.dot(gtt_ref[0], onehot, preferred_element_type=jnp.float32)  # (4, Np)

    # --- bbox_transform_batch(anchors, matched_gt), packed as (2, Np) row groups ------
    m_lo = matched[0:2, :]                     # (2, Np): mx1, my1
    m_hi = matched[2:4, :]                     # (2, Np): mx2, my2
    m_wh = m_hi - m_lo + 1.0                   # (2, Np): m_w, m_h
    m_c = m_lo + 0.5 * m_wh                    # (2, Np): m_cx, m_cy
    inv_ex = 1.0 / ex_wh                       # exact; reused for dx/dy and dw/dh
    d_xy = (m_c - ex_c) * inv_ex               # (2, Np): dx, dy
    d_wh = jnp.log(m_wh * inv_ex)              # (2, Np): dw, dh  (single EUP pass)
    keep_in = inside > 0.5                     # (1, Np)
    # _unmap(fill=0) folded in; slice stores, no sublane concatenates.
    tgt_ref[0, 0:2, :] = jnp.where(keep_in, d_xy, 0.0)
    tgt_ref[0, 2:4, :] = jnp.where(keep_in, d_wh, 0.0)


def anchor_targets_pallas(anchor_data, gt_boxes, gt_boxes_t):
    """anchor_data: (8, Np) f32; gt_boxes: (B, K, 4); gt_boxes_t: (B, 4, K)."""
    rows, n_pad = anchor_data.shape
    B, K, _ = gt_boxes.shape

    # Explicit VMEM budget: resident slab + live (K, Np) temps + double-buffered outputs.
    k_pad = ((K + 7) // 8) * 8
    est = 4 * n_pad * (rows + 14 * k_pad + 2 * 2 * 5)
    vmem_limit = int(min(max(32 << 20, est * 2 + (4 << 20)), 64 << 20))
    # TODO(synk): for FPN-scale anchor counts (Np >> 100K) add a lane-tile grid axis with
    # a two-pass gt_max so the (K, Np) intermediates fit v7x's 64 MiB VMEM.

    out_shape = [
        jax.ShapeDtypeStruct((B, 1, n_pad), jnp.float32),      # labels
        jax.ShapeDtypeStruct((B, 4, n_pad), jnp.float32),      # bbox_targets (coord-major)
    ]
    grid_spec = pltpu.PrefetchScalarGridSpec(
        num_scalar_prefetch=0,
        grid=(B,),
        in_specs=[
            pl.BlockSpec((rows, n_pad), lambda b: (0, 0)),     # resident across the batch
            pl.BlockSpec((1, K, 4), lambda b: (b, 0, 0)),
            pl.BlockSpec((1, 4, K), lambda b: (b, 0, 0)),
        ],
        out_specs=[
            pl.BlockSpec((1, 1, n_pad), lambda b: (b, 0, 0)),
            pl.BlockSpec((1, 4, n_pad), lambda b: (b, 0, 0)),
        ],
    )
    labels, tgts = pl.pallas_call(
        _anchor_target_kernel,
        out_shape=out_shape,
        grid_spec=grid_spec,
        compiler_params=pltpu.CompilerParams(
            dimension_semantics=("parallel",),                 # independent batch items
            vmem_limit_bytes=vmem_limit),
    )(anchor_data, gt_boxes, gt_boxes_t)
    return labels, tgts


class AnchorTargetLayerPallas:
    """JAX/Pallas port of _AnchorTargetLayer.forward.

    Takes the FULL anchor set (H*W*A, 4) in feature-map units (flattened (H, W, A) as the
    reference assumes) plus the indices of the "inside" anchors; the inside selection /
    unmap is handled in-kernel via a mask.
    """

    def __init__(self, all_anchors, inds_inside, num_anchors_type=4, feat_hw=(8, 8)):
        all_anchors = jnp.asarray(all_anchors, jnp.float32)    # (total, 4)
        total = all_anchors.shape[0]
        A = num_anchors_type
        H, W = feat_hw
        assert total == A * H * W
        self.num_anchors_type = A
        self.feat_h, self.feat_w = H, W
        self.num_anchors_total = total
        self.inds_inside = inds_inside
        self.num_anchors = int(inds_inside.shape[0])

        # Reorder anchors A-major (A, H, W) once here so forward()'s NCHW plumbing is
        # pure reshapes (no post-kernel full-tensor transposes).
        a_idx = jnp.arange(A)
        hw_idx = jnp.arange(H * W)
        old_of_new = (hw_idx[None, :] * A + a_idx[:, None]).reshape(-1)   # (total,)
        anc = all_anchors[old_of_new]
        inside_hwa = jnp.zeros((total,), jnp.float32).at[jnp.asarray(inds_inside)].set(1.0)
        inside_ahw = inside_hwa[old_of_new]

        # Pad the anchor count to a lane-dense multiple of 128.
        n_pad = max(128, ((total + 127) // 128) * 128)
        self.n_pad = n_pad
        pad = n_pad - total

        scaled = anc * FEAT_STRIDE
        slab_rows = [scaled[:, 0], scaled[:, 1], scaled[:, 2], scaled[:, 3], inside_ahw]
        if pad:
            slab_rows = [jnp.concatenate([r, jnp.zeros((pad,), jnp.float32)])
                         for r in slab_rows]
        zero_row = jnp.zeros((n_pad,), jnp.float32)
        slab_rows = slab_rows + [zero_row] * (_ADAT_ROWS - len(slab_rows))
        self._anchor_data = jnp.stack(slab_rows, axis=0).astype(jnp.float32)  # (8, n_pad)

    def forward(self, inputs):
        rpn_cls_score, gt_boxes, im_info = inputs
        A = self.num_anchors_type
        H, W = rpn_cls_score.shape[2], rpn_cls_score.shape[3]
        B = gt_boxes.shape[0]
        total = self.num_anchors_total

        gt = gt_boxes[:, :, :4].astype(jnp.float32)            # (B, K, 4)
        gt_t = jnp.transpose(gt, (0, 2, 1))                    # (B, 4, K) for MXU gather
        labels_p, tgts_p = anchor_targets_pallas(self._anchor_data, gt, gt_t)

        # Strip lane padding; everything below is in A-major (A, H, W) anchor order.
        labels_full = labels_p[:, 0, :total]                   # (B, total)
        tgts_full = tgts_p[:, :, :total]                       # (B, 4, total)

        # TODO(synk): fg/bg random subsampling (np.random.permutation over dynamic
        # nonzero sets, RPN_BATCHSIZE / RPN_FG_FRACTION) has no clean Pallas equivalent;
        # with num inside anchors <= RPN_BATCHSIZE (as in this demo) the reference never
        # triggers it either.

        # Inside weights / valid mask derived from labels (saves 2 Np-wide kernel outputs).
        biw_full = jnp.where(labels_full == 1.0, RPN_BBOX_INSIDE_WEIGHT, 0.0)
        valid_full = (labels_full >= 0.0).astype(jnp.float32)

        # Outside weights: RPN_POSITIVE_WEIGHT < 0 -> uniform 1/num_examples.
        # NOTE: the given reference computes num_examples as a GLOBAL sum over the whole
        # labels tensor (torch.sum(labels >= 0)), not per image — we match that here.
        num_examples = jnp.sum(valid_full)
        bow_full = valid_full * (1.0 / num_examples)

        # NCHW outputs (PyTorch conventions). A-major ordering makes these pure reshapes
        # except one tiny (4, A) transpose for the targets.
        out_labels = labels_full.reshape(B, A, H, W).reshape(B, 1, A * H, W)
        out_tgts = jnp.transpose(tgts_full.reshape(B, 4, A, H * W),
                                 (0, 2, 1, 3)).reshape(B, 4 * A, H, W)
        out_biw = jnp.broadcast_to(biw_full.reshape(B, A, 1, H, W),
                                   (B, A, 4, H, W)).reshape(B, 4 * A, H, W)
        out_bow = jnp.broadcast_to(bow_full.reshape(B, A, 1, H, W),
                                   (B, A, 4, H, W)).reshape(B, 4 * A, H, W)
        return [out_labels, out_tgts, out_biw, out_bow]


if __name__ == "__main__":
    B, A, H, W, K = 2, 4, 8, 8, 8
    im_h, im_w = H * 16, W * 16

    # Deterministic synthetic anchors over the feature grid, ordered (H, W, A),
    # in feature-map units (the reference multiplies by 16 before IoU).
    sizes = jnp.array([0.5, 1.0, 1.5, 2.0], dtype=jnp.float32)
    base = jnp.stack([-sizes, -sizes, sizes, sizes], axis=1)            # (A, 4)
    sx, sy = jnp.meshgrid(jnp.arange(W, dtype=jnp.float32),
                          jnp.arange(H, dtype=jnp.float32))
    shifts = jnp.stack([sx.ravel(), sy.ravel(), sx.ravel(), sy.ravel()], axis=1)
    all_anchors = (shifts[:, None, :] + base[None, :, :]).reshape(H * W * A, 4)
    scaled = all_anchors * 16.0
    inside = ((scaled[:, 0] >= 0) & (scaled[:, 1] >= 0) &
              (scaled[:, 2] < im_w) & (scaled[:, 3] < im_h))
    inds_inside = jnp.nonzero(inside)[0]

    key = jax.random.PRNGKey(0)
    k1, k2, k3 = jax.random.split(key, 3)
    ctr = jax.random.uniform(k1, (B, K, 2), minval=24.0, maxval=104.0)
    half = jax.random.uniform(k2, (B, K, 2), minval=8.0, maxval=40.0)
    gt_boxes = jnp.concatenate([ctr - half, ctr + half], axis=-1).astype(jnp.float32)
    rpn_cls_score = jax.random.normal(k3, (B, 2 * A, H, W), dtype=jnp.float32)
    im_info = jnp.array([[float(im_h), float(im_w)]] * B, dtype=jnp.float32)

    layer = AnchorTargetLayerPallas(all_anchors, inds_inside,
                                    num_anchors_type=A, feat_hw=(H, W))
    outs = layer.forward([rpn_cls_score, gt_boxes, im_info])
    for o in outs:
        jax.block_until_ready(o)
    assert outs[0].shape == (B, 1, A * H, W)
    assert outs[1].shape == (B, 4 * A, H, W)
    assert outs[2].shape == (B, 4 * A, H, W)
    assert outs[3].shape == (B, 4 * A, H, W)
    assert bool(jnp.all(jnp.isfinite(outs[1])))
    print("KERNEL_OK")
</pallas_src>

<mosaic_0001>
module attributes {stable_mosaic.version = 11 : i64} {
  func.func @_anchor_target_kernel(%arg0: i32, %arg1: memref<8x256xf32, #tpu.memory_space<vmem>>, %arg2: memref<1x8x4xf32, #tpu.memory_space<vmem>>, %arg3: memref<1x4x8xf32, #tpu.memory_space<vmem>>, %arg4: memref<1x1x256xf32, #tpu.memory_space<vmem>>, %arg5: memref<1x4x256xf32, #tpu.memory_space<vmem>>) attributes {dimension_semantics = [#tpu.dimension_semantics<parallel>], iteration_bounds = array<i64: 2>, scalar_prefetch = 0 : i64, scratch_operands = 0 : i64, tpu.core_type = #tpu.core_type<tc>, window_params = [{pipeline_mode = #tpu.pipeline_mode<synchronous>, transform_indices = @transform_0, window_bounds = array<i64: 8, 256>}, {transform_indices = @transform_1, window_bounds = array<i64: 1, 8, 4>}, {transform_indices = @transform_2, window_bounds = array<i64: 1, 4, 8>}, {transform_indices = @transform_3, window_bounds = array<i64: 1, 1, 256>}, {transform_indices = @transform_4, window_bounds = array<i64: 1, 4, 256>}]} {
    %c0 = arith.constant 0 : index
    %c0_0 = arith.constant 0 : index
    %0 = vector.load %arg1[%c0, %c0_0] : memref<8x256xf32, #tpu.memory_space<vmem>>, vector<1x256xf32>
    %c1 = arith.constant 1 : index
    %c0_1 = arith.constant 0 : index
    %1 = vector.load %arg1[%c1, %c0_1] : memref<8x256xf32, #tpu.memory_space<vmem>>, vector<1x256xf32>
    %c2 = arith.constant 2 : index
    %c0_2 = arith.constant 0 : index
    %2 = vector.load %arg1[%c2, %c0_2] : memref<8x256xf32, #tpu.memory_space<vmem>>, vector<1x256xf32>
    %c3 = arith.constant 3 : index
    %c0_3 = arith.constant 0 : index
    %3 = vector.load %arg1[%c3, %c0_3] : memref<8x256xf32, #tpu.memory_space<vmem>>, vector<1x256xf32>
    %c4 = arith.constant 4 : index
    %c0_4 = arith.constant 0 : index
    %4 = vector.load %arg1[%c4, %c0_4] : memref<8x256xf32, #tpu.memory_space<vmem>>, vector<1x256xf32>
    %c0_5 = arith.constant 0 : index
    %c0_6 = arith.constant 0 : index
    %5 = vector.load %arg1[%c0_5, %c0_6] : memref<8x256xf32, #tpu.memory_space<vmem>>, vector<2x256xf32>
    %c2_7 = arith.constant 2 : index
    %c0_8 = arith.constant 0 : index
    %6 = vector.load %arg1[%c2_7, %c0_8] : memref<8x256xf32, #tpu.memory_space<vmem>>, vector<2x256xf32>
    %7 = arith.subf %6, %5 : vector<2x256xf32>
    %cst = arith.constant 1.000000e+00 : f32
    %8 = vector.broadcast %cst : f32 to vector<2x256xf32>
    %9 = arith.addf %7, %8 : vector<2x256xf32>
    %10 = vector.extract_strided_slice %9 {offsets = [0, 0], sizes = [1, 256], strides = [1, 1]} : vector<2x256xf32> to vector<1x256xf32>
    %11 = vector.extract_strided_slice %9 {offsets = [1, 0], sizes = [1, 256], strides = [1, 1]} : vector<2x256xf32> to vector<1x256xf32>
    %12 = arith.mulf %10, %11 : vector<1x256xf32>
    %cst_9 = arith.constant 1.000000e+00 : f32
    %13 = vector.broadcast %cst_9 : f32 to vector<1x256xf32>
    %14 = arith.cmpf oeq, %10, %13 : vector<1x256xf32>
    %cst_10 = arith.constant 1.000000e+00 : f32
    %15 = vector.broadcast %cst_10 : f32 to vector<1x256xf32>
    %16 = arith.cmpf oeq, %11, %15 : vector<1x256xf32>
    %17 = arith.andi %14, %16 : vector<1x256xi1>
    %cst_11 = arith.constant 1.000000e+00 : f32
    %18 = vector.broadcast %cst_11 : f32 to vector<2x256xf32>
    %19 = arith.subf %9, %18 : vector<2x256xf32>
    %cst_12 = arith.constant 6.250000e-02 : f32
    %20 = vector.broadcast %cst_12 : f32 to vector<2x256xf32>
    %21 = arith.mulf %19, %20 : vector<2x256xf32>
    %cst_13 = arith.constant 1.000000e+00 : f32
    %22 = vector.broadcast %cst_13 : f32 to vector<2x256xf32>
    %23 = arith.addf %21, %22 : vector<2x256xf32>
    %cst_14 = arith.constant 6.250000e-02 : f32
    %24 = vector.broadcast %cst_14 : f32 to vector<2x256xf32>
    %25 = arith.mulf %5, %24 : vector<2x256xf32>
    %cst_15 = arith.constant 5.000000e-01 : f32
    %26 = vector.broadcast %cst_15 : f32 to vector<2x256xf32>
    %27 = arith.mulf %26, %23 : vector<2x256xf32>
    %28 = arith.addf %25, %27 : vector<2x256xf32>
    %c0_16 = arith.constant 0 : index
    %c0_17 = arith.constant 0 : index
    %c0_18 = arith.constant 0 : index
    %29 = vector.load %arg2[%c0_16, %c0_17, %c0_18] : memref<1x8x4xf32, #tpu.memory_space<vmem>>, vector<1x8x4xf32>
    %30 = vector.shape_cast %29 : vector<1x8x4xf32> to vector<8x4xf32>
    %31 = vector.extract_strided_slice %30 {offsets = [0, 0], sizes = [8, 1], strides = [1, 1]} : vector<8x4xf32> to vector<8x1xf32>
    %32 = vector.extract_strided_slice %30 {offsets = [0, 1], sizes = [8, 1], strides = [1, 1]} : vector<8x4xf32> to vector<8x1xf32>
    %33 = vector.extract_strided_slice %30 {offsets = [0, 2], sizes = [8, 1], strides = [1, 1]} : vector<8x4xf32> to vector<8x1xf32>
    %34 = vector.extract_strided_slice %30 {offsets = [0, 3], sizes = [8, 1], strides = [1, 1]} : vector<8x4xf32> to vector<8x1xf32>
    %35 = arith.subf %33, %31 : vector<8x1xf32>
    %cst_19 = arith.constant 1.000000e+00 : f32
    %36 = vector.broadcast %cst_19 : f32 to vector<8x1xf32>
    %37 = arith.addf %35, %36 : vector<8x1xf32>
    %38 = arith.subf %34, %32 : vector<8x1xf32>
    %cst_20 = arith.constant 1.000000e+00 : f32
    %39 = vector.broadcast %cst_20 : f32 to vector<8x1xf32>
    %40 = arith.addf %38, %39 : vector<8x1xf32>
    %41 = arith.mulf %37, %40 : vector<8x1xf32>
    %cst_21 = arith.constant 1.000000e+00 : f32
    %42 = vector.broadcast %cst_21 : f32 to vector<8x1xf32>
    %43 = arith.cmpf oeq, %37, %42 : vector<8x1xf32>
    %cst_22 = arith.constant 1.000000e+00 : f32
    %44 = vector.broadcast %cst_22 : f32 to vector<8x1xf32>
    %45 = arith.cmpf oeq, %40, %44 : vector<8x1xf32>
    %46 = arith.andi %43, %45 : vector<8x1xi1>
    %47 = vector.broadcast %2 : vector<1x256xf32> to vector<8x256xf32>
    %48 = vector.broadcast %33 : vector<8x1xf32> to vector<8x256xf32>
    %49 = arith.minimumf %47, %48 : vector<8x256xf32>
    %50 = vector.broadcast %0 : vector<1x256xf32> to vector<8x256xf32>
    %51 = vector.broadcast %31 : vector<8x1xf32> to vector<8x256xf32>
    %52 = arith.maximumf %50, %51 : vector<8x256xf32>
    %53 = arith.subf %49, %52 : vector<8x256xf32>
    %cst_23 = arith.constant 1.000000e+00 : f32
    %54 = vector.broadcast %cst_23 : f32 to vector<8x256xf32>
    %55 = arith.addf %53, %54 : vector<8x256xf32>
    %cst_24 = arith.constant 0.000000e+00 : f32
    %56 = vector.broadcast %cst_24 : f32 to vector<8x256xf32>
    %57 = arith.maximumf %55, %56 : vector<8x256xf32>
    %58 = vector.broadcast %3 : vector<1x256xf32> to vector<8x256xf32>
    %59 = vector.broadcast %34 : vector<8x1xf32> to vector<8x256xf32>
    %60 = arith.minimumf %58, %59 : vector<8x256xf32>
    %61 = vector.broadcast %1 : vector<1x256xf32> to vector<8x256xf32>
    %62 = vector.broadcast %32 : vector<8x1xf32> to vector<8x256xf32>
    %63 = arith.maximumf %61, %62 : vector<8x256xf32>
    %64 = arith.subf %60, %63 : vector<8x256xf32>
    %cst_25 = arith.constant 1.000000e+00 : f32
    %65 = vector.broadcast %cst_25 : f32 to vector<8x256xf32>
    %66 = arith.addf %64, %65 : vector<8x256xf32>
    %cst_26 = arith.constant 0.000000e+00 : f32
    %67 = vector.broadcast %cst_26 : f32 to vector<8x256xf32>
    %68 = arith.maximumf %66, %67 : vector<8x256xf32>
    %69 = arith.mulf %57, %68 : vector<8x256xf32>
    %70 = vector.broadcast %12 : vector<1x256xf32> to vector<8x256xf32>
    %71 = vector.broadcast %41 : vector<8x1xf32> to vector<8x256xf32>
    %72 = arith.addf %70, %71 : vector<8x256xf32>
    %73 = arith.subf %72, %69 : vector<8x256xf32>
    %74 = tpu.reciprocal %73 {approx = true} : vector<8x256xf32> -> vector<8x256xf32>
    %75 = arith.mulf %69, %74 : vector<8x256xf32>
    %cst_27 = arith.constant 0.000000e+00 : f32
    %76 = vector.shape_cast %46 : vector<8x1xi1> to vector<8x1xi1>
    %77 = vector.broadcast %76 : vector<8x1xi1> to vector<8x256xi1>
    %78 = vector.broadcast %cst_27 : f32 to vector<8x256xf32>
    %79 = arith.select %77, %78, %75 : vector<8x256xi1>, vector<8x256xf32>
    %cst_28 = arith.constant 5.000000e-01 : f32
    %80 = vector.broadcast %cst_28 : f32 to vector<1x256xf32>
    %81 = arith.cmpf olt, %4, %80 : vector<1x256xf32>
    %82 = arith.ori %17, %81 : vector<1x256xi1>
    %cst_29 = arith.constant -1.000000e+00 : f32
    %83 = vector.shape_cast %82 : vector<1x256xi1> to vector<1x256xi1>
    %84 = vector.broadcast %83 : vector<1x256xi1> to vector<8x256xi1>
    %85 = vector.broadcast %cst_29 : f32 to vector<8x256xf32>
    %86 = arith.select %84, %85, %79 : vector<8x256xi1>, vector<8x256xf32>
    %cst_30 = arith.constant dense<0xFF800000> : vector<256xf32>
    %87 = vector.multi_reduction <maximumf>, %86, %cst_30 [0] : vector<8x256xf32> to vector<256xf32>
    %88 = vector.shape_cast %87 : vector<256xf32> to vector<1x256xf32>
    %cst_31 = arith.constant dense<0xFF800000> : vector<8xf32>
    %89 = vector.multi_reduction <maximumf>, %86, %cst_31 [1] : vector<8x256xf32> to vector<8xf32>
    %90 = vector.shape_cast %89 : vector<8xf32> to vector<8x1xf32>
    %cst_32 = arith.constant 0.000000e+00 : f32
    %91 = vector.broadcast %cst_32 : f32 to vector<8x1xf32>
    %92 = arith.cmpf oeq, %90, %91 : vector<8x1xf32>
    %cst_33 = arith.constant 9.99999974E-6 : f32
    %93 = vector.broadcast %cst_33 : f32 to vector<8x1xf32>
    %94 = arith.select %92, %93, %90 : vector<8x1xi1>, vector<8x1xf32>
    %95 = vector.broadcast %94 : vector<8x1xf32> to vector<8x256xf32>
    %96 = arith.cmpf oeq, %86, %95 : vector<8x256xf32>
    %97 = arith.extui %96 : vector<8x256xi1> to vector<8x256xi32>
    %98 = arith.sitofp %97 : vector<8x256xi32> to vector<8x256xf32>
    %cst_34 = arith.constant dense<0.000000e+00> : vector<256xf32>
    %99 = vector.multi_reduction <add>, %98, %cst_34 [0] : vector<8x256xf32> to vector<256xf32>
    %100 = vector.shape_cast %99 : vector<256xf32> to vector<1x256xf32>
    %cst_35 = arith.constant 3.000000e-01 : f32
    %101 = vector.broadcast %cst_35 : f32 to vector<1x256xf32>
    %102 = arith.cmpf olt, %88, %101 : vector<1x256xf32>
    %cst_36 = arith.constant 0.000000e+00 : f32
    %cst_37 = arith.constant -1.000000e+00 : f32
    %103 = vector.broadcast %cst_36 : f32 to vector<1x256xf32>
    %104 = vector.broadcast %cst_37 : f32 to vector<1x256xf32>
    %105 = arith.select %102, %103, %104 : vector<1x256xi1>, vector<1x256xf32>
    %cst_38 = arith.constant 0.000000e+00 : f32
    %106 = vector.broadcast %cst_38 : f32 to vector<1x256xf32>
    %107 = arith.cmpf ogt, %100, %106 : vector<1x256xf32>
    %cst_39 = arith.constant 1.000000e+00 : f32
    %108 = vector.broadcast %cst_39 : f32 to vector<1x256xf32>
    %109 = arith.select %107, %108, %105 : vector<1x256xi1>, vector<1x256xf32>
    %cst_40 = arith.constant 0.699999988 : f32
    %110 = vector.broadcast %cst_40 : f32 to vector<1x256xf32>
    %111 = arith.cmpf oge, %88, %110 : vector<1x256xf32>
    %cst_41 = arith.constant 1.000000e+00 : f32
    %112 = vector.broadcast %cst_41 : f32 to vector<1x256xf32>
    %113 = arith.select %111, %112, %109 : vector<1x256xi1>, vector<1x256xf32>
    %cst_42 = arith.constant 5.000000e-01 : f32
    %114 = vector.broadcast %cst_42 : f32 to vector<1x256xf32>
    %115 = arith.cmpf ogt, %4, %114 : vector<1x256xf32>
    %cst_43 = arith.constant -1.000000e+00 : f32
    %116 = vector.broadcast %cst_43 : f32 to vector<1x256xf32>
    %117 = arith.select %115, %113, %116 : vector<1x256xi1>, vector<1x256xf32>
    %c0_44 = arith.constant 0 : index
    %c0_45 = arith.constant 0 : index
    %c0_46 = arith.constant 0 : index
    %118 = vector.load %arg4[%c0_44, %c0_45, %c0_46] : memref<1x1x256xf32, #tpu.memory_space<vmem>>, vector<1x1x256xf32>
    %119 = vector.shape_cast %118 : vector<1x1x256xf32> to vector<1x256xf32>
    %120 = vector.shape_cast %117 : vector<1x256xf32> to vector<1x1x256xf32>
    tpu.vector_store %arg4[%c0_44, %c0_45, %c0_46], %120 {strides = array<i32>} : memref<1x1x256xf32, #tpu.memory_space<vmem>>, vector<1x1x256xf32>,
    %121 = tpu.iota {dimensions = array<i32: 0>} : vector<8x256xi32>
    %122 = vector.broadcast %88 : vector<1x256xf32> to vector<8x256xf32>
    %123 = arith.cmpf oeq, %86, %122 : vector<8x256xf32>
    %c8_i32 = arith.constant 8 : i32
    %124 = vector.broadcast %c8_i32 : i32 to vector<8x256xi32>
    %125 = arith.select %123, %121, %124 : vector<8x256xi1>, vector<8x256xi32>
    %cst_47 = arith.constant dense<2147483647> : vector<256xi32>
    %126 = vector.multi_reduction <minsi>, %125, %cst_47 [0] : vector<8x256xi32> to vector<256xi32>
    %127 = vector.shape_cast %126 : vector<256xi32> to vector<1x256xi32>
    %128 = vector.broadcast %127 : vector<1x256xi32> to vector<8x256xi32>
    %129 = arith.cmpi eq, %121, %128 : vector<8x256xi32>
    %130 = arith.extui %129 : vector<8x256xi1> to vector<8x256xi32>
    %131 = arith.sitofp %130 : vector<8x256xi32> to vector<8x256xf32>
    %c0_48 = arith.constant 0 : index
    %c0_49 = arith.constant 0 : index
    %c0_50 = arith.constant 0 : index
    %132 = vector.load %arg3[%c0_48, %c0_49, %c0_50] : memref<1x4x8xf32, #tpu.memory_space<vmem>>, vector<1x4x8xf32>
    %133 = vector.shape_cast %132 : vector<1x4x8xf32> to vector<4x8xf32>
    %cst_51 = arith.constant dense<0.000000e+00> : vector<4x256xf32>
    %134 = tpu.matmul %133, %131, %cst_51 {dimension_numbers = #tpu.dot_dimension_numbers<[1], [0], [0], [1], [0, 0, 1, 1], [], []>} : vector<4x8xf32>, vector<8x256xf32>, vector<4x256xf32> -> vector<4x256xf32>
    %135 = vector.extract_strided_slice %134 {offsets = [0, 0], sizes = [2, 256], strides = [1, 1]} : vector<4x256xf32> to vector<2x256xf32>
    %136 = vector.extract_strided_slice %134 {offsets = [2, 0], sizes = [2, 256], strides = [1, 1]} : vector<4x256xf32> to vector<2x256xf32>
    %137 = arith.subf %136, %135 : vector<2x256xf32>
    %cst_52 = arith.constant 1.000000e+00 : f32
    %138 = vector.broadcast %cst_52 : f32 to vector<2x256xf32>
    %139 = arith.addf %137, %138 : vector<2x256xf32>
    %cst_53 = arith.constant 5.000000e-01 : f32
    %140 = vector.broadcast %cst_53 : f32 to vector<2x256xf32>
    %141 = arith.mulf %140, %139 : vector<2x256xf32>
    %142 = arith.addf %135, %141 : vector<2x256xf32>
    %cst_54 = arith.constant 1.000000e+00 : f32
    %143 = vector.broadcast %cst_54 : f32 to vector<2x256xf32>
    %144 = arith.divf %143, %23 : vector<2x256xf32>
    %145 = arith.subf %142, %28 : vector<2x256xf32>
    %146 = arith.mulf %145, %144 : vector<2x256xf32>
    %147 = arith.mulf %139, %144 : vector<2x256xf32>
    %148 = math.log %147 : vector<2x256xf32>
    %cst_55 = arith.constant 5.000000e-01 : f32
    %149 = vector.broadcast %cst_55 : f32 to vector<1x256xf32>
    %150 = arith.cmpf ogt, %4, %149 : vector<1x256xf32>
    %cst_56 = arith.constant 0.000000e+00 : f32
    %151 = vector.shape_cast %150 : vector<1x256xi1> to vector<1x256xi1>
    %152 = vector.broadcast %151 : vector<1x256xi1> to vector<2x256xi1>
    %153 = vector.broadcast %cst_56 : f32 to vector<2x256xf32>
    %154 = arith.select %152, %146, %153 : vector<2x256xi1>, vector<2x256xf32>
    %c0_57 = arith.constant 0 : index
    %c0_58 = arith.constant 0 : index
    %c0_59 = arith.constant 0 : index
    %155 = vector.load %arg5[%c0_57, %c0_58, %c0_59] : memref<1x4x256xf32, #tpu.memory_space<vmem>>, vector<1x2x256xf32>
    %156 = vector.shape_cast %155 : vector<1x2x256xf32> to vector<2x256xf32>
    %157 = vector.shape_cast %154 : vector<2x256xf32> to vector<1x2x256xf32>
    tpu.vector_store %arg5[%c0_57, %c0_58, %c0_59], %157 {strides = array<i32>} : memref<1x4x256xf32, #tpu.memory_space<vmem>>, vector<1x2x256xf32>,
    %cst_60 = arith.constant 0.000000e+00 : f32
    %158 = vector.shape_cast %150 : vector<1x256xi1> to vector<1x256xi1>
    %159 = vector.broadcast %158 : vector<1x256xi1> to vector<2x256xi1>
    %160 = vector.broadcast %cst_60 : f32 to vector<2x256xf32>
    %161 = arith.select %159, %148, %160 : vector<2x256xi1>, vector<2x256xf32>
    %c0_61 = arith.constant 0 : index
    %c2_62 = arith.constant 2 : index
    %c0_63 = arith.constant 0 : index
    %162 = vector.load %arg5[%c0_61, %c2_62, %c0_63] : memref<1x4x256xf32, #tpu.memory_space<vmem>>, vector<1x2x256xf32>
    %163 = vector.shape_cast %162 : vector<1x2x256xf32> to vector<2x256xf32>
    %164 = vector.shape_cast %161 : vector<2x256xf32> to vector<1x2x256xf32>
    tpu.vector_store %arg5[%c0_61, %c2_62, %c0_63], %164 {strides = array<i32>} : memref<1x4x256xf32, #tpu.memory_space<vmem>>, vector<1x2x256xf32>,
    return
  }
  func.func @transform_0(%arg0: i32) -> (i32, i32) {
    %c0_i32 = arith.constant 0 : i32
    %c0_i32_0 = arith.constant 0 : i32
    %c0_i32_1 = arith.constant 0 : i32
    return %c0_i32, %c0_i32_0 : i32, i32
  }
  func.func @transform_1(%arg0: i32) -> (i32, i32, i32) {
    %c0_i32 = arith.constant 0 : i32
    %c0_i32_0 = arith.constant 0 : i32
    %c0_i32_1 = arith.constant 0 : i32
    return %arg0, %c0_i32, %c0_i32_0 : i32, i32, i32
  }
  func.func @transform_2(%arg0: i32) -> (i32, i32, i32) {
    %c0_i32 = arith.constant 0 : i32
    %c0_i32_0 = arith.constant 0 : i32
    %c0_i32_1 = arith.constant 0 : i32
    return %arg0, %c0_i32, %c0_i32_0 : i32, i32, i32
  }
  func.func @transform_3(%arg0: i32) -> (i32, i32, i32) {
    %c0_i32 = arith.constant 0 : i32
    %c0_i32_0 = arith.constant 0 : i32
    %c0_i32_1 = arith.constant 0 : i32
    return %arg0, %c0_i32, %c0_i32_0 : i32, i32, i32
  }
  func.func @transform_4(%arg0: i32) -> (i32, i32, i32) {
    %c0_i32 = arith.constant 0 : i32
    %c0_i32_0 = arith.constant 0 : i32
    %c0_i32_1 = arith.constant 0 : i32
    return %arg0, %c0_i32, %c0_i32_0 : i32, i32, i32
  }
}

</mosaic_0001>

<llo_original>
// kernel: tpu_custom_call.1
$region0: #{tpu_custom_call.1}
  #allocation0 [shape = 'u32[]', space=smem, size = 0x4, offset = 0x4, fixed_abs, tag = 'smem constant byte address 0x4 - core index']
  #allocation1 [shape = 'u32[144,128]{1,0:T(1,128)}', space=vmem, size = 0x12000, scoped, tag = 'internal scratch']
  %s0 = inlined_call_operand.vmem [shape: f32[8,256], index: 0, kind: input, shape index: {}]
  %s1 = inlined_call_operand.vmem [shape: f32[2,8,4], index: 1, kind: input, shape index: {}]
  %s2 = inlined_call_operand.vmem [shape: f32[2,4,8], index: 2, kind: input, shape index: {}]
  %s3 = inlined_call_operand.hbm [shape: f32[2,1,256], index: 3, kind: output, shape index: {0}]
  %s4 = inlined_call_operand.hbm [shape: f32[2,4,256], index: 4, kind: output, shape index: {1}]
  %5 = xla_tuple %s3, %s4
  %s6 = sld [smem:[#allocation0]]
  $region53: #{tpu_custom_call.1} parent=0
    _
  %s8 = ssub.s32 1, %s6
  %s9 = scalar_select 0, %s8, %s6
  $region1: #{tpu_custom_call.1} parent=0
    #allocation2 [shape = 'u8[2048]{0}', space=vmem, size = 0x800, scoped, tag = 'output window, operand 0']
    #allocation3 [shape = 's32[2]{0}', space=sflag, size = 0x8, scoped, tag = 'scoped memory for tpu_custom_call.1']
    #allocation4 [shape = 'u8[8192]{0}', space=vmem, size = 0x2000, scoped, tag = 'output window, operand 1']
    #allocation5 [shape = 's32[2]{0}', space=sflag, size = 0x8, scoped, tag = 'scoped memory for tpu_custom_call.1']
    %10 = vsyncpa [#allocation3], 0
    %s11 = scalar_lea.sflag [#allocation3], 1
    %12 = vsyncpa %s11, 0
    %13 = vsyncpa [#allocation5], 0
    %s14 = scalar_lea.sflag [#allocation5], 1
    %15 = vsyncpa %s14, 0
    loop: start=0, step=1, limit=4
    $region2: #{tpu_custom_call.1} parent=1 // loop_pre_header
      _
    $region3: #{tpu_custom_call.1} parent=1 // loop_header
      %s17 = sphi 0, %s21
      %p18 = scmp.ge.s32.totalorder %s17, 4
      %s25 = sphi 0, %s25
      %s27 = sphi 0, %s25
      %s28 = sphi 0, %s27
      %s42 = sphi 0, %s28
      %s48 = sphi 0, %s50
      %s51 = sphi 0, %s48
      %s52 = sphi 0, %s51
      %s68 = sphi 0, %s52
      %s74 = sphi 0, %s76
      %s77 = sphi 0, %s74
      %s78 = sphi 0, %s77
      %s94 = sphi 0, %s78
      %s100 = sphi 0, %s102
      %s103 = sphi 0, %s100
      %s104 = sphi 0, %s103
      %s120 = sphi 0, %s104
      %s126 = sphi 0, %s128
      %s129 = sphi 0, %s126
      %s130 = sphi 0, %s129
      %s146 = sphi 0, %s130
    $region4: #{tpu_custom_call.1} parent=1 // loop_header_branch
      %20 = sbr.rel (%p18) target = $region8
    $region5: #{tpu_custom_call.1} parent=1 // loop_body
      %s22 = ssub.s32 %s17, 1
      %s23 = ssub.s32 %s17, 2
      %s24 = sadd.s32 %s17, 1
      %s26 = sadd.s32 %s25, 1
      %p29 = scmp.eq.s32.totalorder %s17, 1
      %p30 = scmp.ne.s32.totalorder %s25, %s27
      %p31 = scmp.eq.s32.totalorder %s17, 0
      %p32 = por %p30, %p31
      %p33 = scmp.ne.s32.totalorder %s25, %s27
      %p34 = scmp.eq.s32.totalorder %s22, 1
      %p35 = por %p33, %p34
      %p36 = scmp.ne.s32.totalorder %s27, %s28
      %p37 = scmp.eq.s32.totalorder %s22, 0
      %p38 = por %p36, %p37
      %p39 = scmp.ne.s32.totalorder %s27, %s28
      %p40 = scmp.eq.s32.totalorder %s23, 1
      %p41 = por %p39, %p40
      %p43 = scmp.ne.s32.totalorder %s28, %s42
      %p44 = scmp.eq.s32.totalorder %s23, 0
      %p45 = por %p43, %p44
      %s46 = ssub.s32 %s17, %s24
      %p47 = scmp.eq.s32.totalorder %s46, 0
      %s49 = sadd.s32 %s48, 1
      %s50 = scalar_select %p47, %s48, %s49
      %p53 = pneg %p47
      %p54 = scmp.eq.s32.totalorder %s17, 1
      %p55 = por %p53, %p54
      %p56 = scmp.ne.s32.totalorder %s48, %s51
      %p57 = scmp.eq.s32.totalorder %s17, 0
      %p58 = por %p56, %p57
      %p59 = scmp.ne.s32.totalorder %s48, %s51
      %p60 = scmp.eq.s32.totalorder %s22, 1
      %p61 = por %p59, %p60
      %p62 = scmp.ne.s32.totalorder %s51, %s52
      %p63 = scmp.eq.s32.totalorder %s22, 0
      %p64 = por %p62, %p63
      %p65 = scmp.ne.s32.totalorder %s51, %s52
      %p66 = scmp.eq.s32.totalorder %s23, 1
      %p67 = por %p65, %p66
      %p69 = scmp.ne.s32.totalorder %s52, %s68
      %p70 = scmp.eq.s32.totalorder %s23, 0
      %p71 = por %p69, %p70
      %s72 = ssub.s32 %s17, %s24
      %p73 = scmp.eq.s32.totalorder %s72, 0
      %s75 = sadd.s32 %s74, 1
      %s76 = scalar_select %p73, %s74, %s75
      %p79 = pneg %p73
      %p80 = scmp.eq.s32.totalorder %s17, 1
      %p81 = por %p79, %p80
      %p82 = scmp.ne.s32.totalorder %s74, %s77
      %p83 = scmp.eq.s32.totalorder %s17, 0
      %p84 = por %p82, %p83
      %p85 = scmp.ne.s32.totalorder %s74, %s77
      %p86 = scmp.eq.s32.totalorder %s22, 1
      %p87 = por %p85, %p86
      %p88 = scmp.ne.s32.totalorder %s77, %s78
      %p89 = scmp.eq.s32.totalorder %s22, 0
      %p90 = por %p88, %p89
      %p91 = scmp.ne.s32.totalorder %s77, %s78
      %p92 = scmp.eq.s32.totalorder %s23, 1
      %p93 = por %p91, %p92
      %p95 = scmp.ne.s32.totalorder %s78, %s94
      %p96 = scmp.eq.s32.totalorder %s23, 0
      %p97 = por %p95, %p96
      %s98 = ssub.s32 %s17, %s24
      %p99 = scmp.eq.s32.totalorder %s98, 0
      %s101 = sadd.s32 %s100, 1
      %s102 = scalar_select %p99, %s100, %s101
      %p105 = pneg %p99
      %p106 = scmp.eq.s32.totalorder %s17, 1
      %p107 = por %p105, %p106
      %p108 = scmp.ne.s32.totalorder %s100, %s103
      %p109 = scmp.eq.s32.totalorder %s17, 0
      %p110 = por %p108, %p109
      %p111 = scmp.ne.s32.totalorder %s100, %s103
      %p112 = scmp.eq.s32.totalorder %s22, 1
      %p113 = por %p111, %p112
      %p114 = scmp.ne.s32.totalorder %s103, %s104
      %p115 = scmp.eq.s32.totalorder %s22, 0
      %p116 = por %p114, %p115
      %p117 = scmp.ne.s32.totalorder %s103, %s104
      %p118 = scmp.eq.s32.totalorder %s23, 1
      %p119 = por %p117, %p118
      %p121 = scmp.ne.s32.totalorder %s104, %s120
      %p122 = scmp.eq.s32.totalorder %s23, 0
      %p123 = por %p121, %p122
      %s124 = ssub.s32 %s17, %s24
      %p125 = scmp.eq.s32.totalorder %s124, 0
      %s127 = sadd.s32 %s126, 1
      %s128 = scalar_select %p125, %s126, %s127
      %p131 = pneg %p125
      %p132 = scmp.eq.s32.totalorder %s17, 1
      %p133 = por %p131, %p132
      %p134 = scmp.ne.s32.totalorder %s126, %s129
      %p135 = scmp.eq.s32.totalorder %s17, 0
      %p136 = por %p134, %p135
      %p137 = scmp.ne.s32.totalorder %s126, %s129
      %p138 = scmp.eq.s32.totalorder %s22, 1
      %p139 = por %p137, %p138
      %p140 = scmp.ne.s32.totalorder %s129, %s130
      %p141 = scmp.eq.s32.totalorder %s22, 0
      %p142 = por %p140, %p141
      %p143 = scmp.ne.s32.totalorder %s129, %s130
      %p144 = scmp.eq.s32.totalorder %s23, 1
      %p145 = por %p143, %p144
      %p147 = scmp.ne.s32.totalorder %s130, %s146
      %p148 = scmp.eq.s32.totalorder %s23, 0
      %p149 = por %p147, %p148
      %p150 = scmp.le.s32.totalorder 1, %s17
      %p151 = scmp.lt.s32.totalorder %s17, 3
      %p152 = pnand %p150, %p151
      %p153 = pneg %p152
      // Predicated region
      $region9: #{tpu_custom_call.1} parent=5 // pred_check
        _
      $region10: #{tpu_custom_call.1} parent=5 // pred_check_branch
        %155 = sbr.rel (%p152) target = $region12
      $region11: #{tpu_custom_call.1} parent=5 // pred_region
        %s156 = ssub.s32 %s17, 1
        // Predicated region
        $region13: #{tpu_custom_call.1} parent=11 // pred_check
          %p157 = pneg %p38
        $region14: #{tpu_custom_call.1} parent=11 // pred_check_branch
          %159 = sbr.rel (%p157) target = $region16
        $region15: #{tpu_custom_call.1} parent=11 // pred_region
          _
        $region16: #{tpu_custom_call.1} parent=11 // pred_fallthru
          _
      $region12: #{tpu_custom_call.1} parent=5 // pred_fallthru
        _
      %p160 = scmp.lt.s32.totalorder %s17, 2
      // Predicated region
      $region17: #{tpu_custom_call.1} parent=5 // pred_check
        %p161 = pneg %p160
      $region18: #{tpu_custom_call.1} parent=5 // pred_check_branch
        %163 = sbr.rel (%p161) target = $region20
      $region19: #{tpu_custom_call.1} parent=5 // pred_region
        // Predicated region
        $region21: #{tpu_custom_call.1} parent=19 // pred_check
          %p164 = pneg %p58
        $region22: #{tpu_custom_call.1} parent=19 // pred_check_branch
          %166 = sbr.rel (%p164) target = $region24
        $region23: #{tpu_custom_call.1} parent=19 // pred_region
          %p167 = scmp.lt.s32.totalorder %s17, 1
          %s168 = scalar_select %p167, %s17, 1
          %s169 = smul.addr %s168, 8
          %s170 = scalar_lea.vmem %s1, %s169
        $region24: #{tpu_custom_call.1} parent=19 // pred_fallthru
          _
        // Predicated region
        $region25: #{tpu_custom_call.1} parent=19 // pred_check
          %p171 = pneg %p84
        $region26: #{tpu_custom_call.1} parent=19 // pred_check_branch
          %173 = sbr.rel (%p171) target = $region28
        $region27: #{tpu_custom_call.1} parent=19 // pred_region
          %p174 = scmp.lt.s32.totalorder %s17, 1
          %s175 = scalar_select %p174, %s17, 1
          %s176 = smul.addr %s175, 4
          %s177 = scalar_lea.vmem %s2, %s176
        $region28: #{tpu_custom_call.1} parent=19 // pred_fallthru
          _
      $region20: #{tpu_custom_call.1} parent=5 // pred_fallthru
        _
      %p178 = scmp.le.s32.totalorder 1, %s17
      %p179 = scmp.lt.s32.totalorder %s17, 3
      %p180 = pnand %p178, %p179
      %p181 = pneg %p180
      // Predicated region
      $region29: #{tpu_custom_call.1} parent=5 // pred_check
        _
      $region30: #{tpu_custom_call.1} parent=5 // pred_check_branch
        %183 = sbr.rel (%p180) target = $region32
      $region31: #{tpu_custom_call.1} parent=5 // pred_region
        %s184 = ssub.s32 %s17, 1
        %p185 = pneg %p38
        %p186 = pneg %p35
        %p187 = scmp.lt.s32.totalorder %s22, 1
        %s188 = scalar_select %p187, %s22, 1
        %s189 = smul.addr %s188, 8
        %s190 = scalar_lea.vmem %s1, %s189
        %p191 = pneg %p64
        %p192 = pneg %p61
        %p193 = scmp.lt.s32.totalorder %s22, 1
        %s194 = scalar_select %p193, %s22, 1
        %s195 = smul.addr %s194, 4
        %s196 = scalar_lea.vmem %s2, %s195
        %p197 = pneg %p90
        %p198 = pneg %p87
        %p199 = pneg %p116
        %p200 = pneg %p113
        %s201 = sand.u32 %s103, 1
        %s202 = scalar_lea.sflag [#allocation3], %s201
        %s203 = sand.u32 %s103, 1
        %s204 = smul.addr %s203, 2
        %s205 = scalar_lea.vmem [#allocation2], %s204
        %p206 = pneg %p142
        %p207 = pneg %p139
        %s208 = sand.u32 %s129, 1
        %s209 = scalar_lea.sflag [#allocation5], %s208
        %s210 = sand.u32 %s129, 1
        %s211 = smul.addr %s210, 8
        %s212 = scalar_lea.vmem [#allocation4], %s211
        %p213 = scmp.lt.s32.totalorder %s22, 1
        %s214 = scalar_select %p213, %s22, 1
        %s215 = smul.addr %s214, 8
        %s216 = scalar_lea.vmem %s1, %s215
        %p217 = scmp.lt.s32.totalorder %s22, 1
        %s218 = scalar_select %p217, %s22, 1
        %s219 = smul.addr %s218, 4
        %s220 = scalar_lea.vmem %s2, %s219
        %v221 = vld [vmem:[%s0] ss:$8 sm:$0x3]
        %s222 = scalar_lea.vmem %s0, 1
        %v223 = vld [vmem:[%s222] ss:$8 sm:$0x3]
        %s224 = scalar_lea.vmem %s0, 2
        %v225 = vld [vmem:[%s224] ss:$8 sm:$0x3]
        %s226 = scalar_lea.vmem %s0, 3
        %v227 = vld [vmem:[%s226] ss:$8 sm:$0x3]
        %s228 = scalar_lea.vmem %s0, 4
        %v229 = vld [vmem:[%s228] ss:$8 sm:$0x3]
        %v230 = vld [vmem:[%s0] sm:$0x3]
        %v231 = vld [vmem:[%s0 + $0x8] sm:$0x3]
        %v232 = vld [vmem:[%s0] sm:$0xc]
        %v233 = vld [vmem:[%s0 + $0x8] sm:$0xc]
        %v236 = vrot.slane %v230, 6
        %v237 = vrot.slane %v231, 6
        %v240 = vsub.f32 %v232, %v236
        %v241 = vsub.f32 %v233, %v237
        %v242 = vadd.f32 %v240, 1.0
        %v243 = vadd.f32 %v241, 1.0
        %v246 = vrot.slane %v242, 1
        %v247 = vrot.slane %v243, 1
        %v250 = vmul.f32 %v242, %v246
        %v251 = vmul.f32 %v243, %v247
        %vm252 = vcmp.eq.f32.partialorder %v242, 1.0
        %vm253 = vcmp.eq.f32.partialorder %v243, 1.0
        %v254 = vsel %vm252, 1, 0
        %v255 = vsel %vm253, 1, 0
        %v256 = vrot.slane %v254, 1
        %v257 = vrot.slane %v255, 1
        %vm258 = vcmp.ne.s32.totalorder %v256, 0
        %vm259 = vcmp.ne.s32.totalorder %v257, 0
        %vm260 = vmand %vm252, %vm258
        %vm261 = vmand %vm253, %vm259
        %v262 = vsub.f32 %v242, 1.0
        %v263 = vsub.f32 %v243, 1.0
        %v264 = vmul.f32 %v262, 0.0625
        %v265 = vmul.f32 %v263, 0.0625
        %v266 = vadd.f32 %v264, 1.0
        %v267 = vadd.f32 %v265, 1.0
        %v268 = vmul.f32 %v230, 0.0625
        %v269 = vmul.f32 %v231, 0.0625
        %v270 = vmul.f32 %v266, 0.5
        %v271 = vmul.f32 %v267, 0.5
        %v274 = vrot.slane %v270, 2
        %v275 = vrot.slane %v271, 2
        %v278 = vadd.f32 %v268, %v274
        %v279 = vadd.f32 %v269, %v275
        %v280 = vld [vmem:[%s216] sm:$0xff]
        %282 = vrot.lane.b32.xlu0 %v280, 2
        %v283 = vpop.permute.xlu0 %282
        %v285 = vsub.f32 %v280, %v283
        %v286 = vadd.f32 %v285, 1.0
        %288 = vrot.lane.b32.xlu0 %v286, 127
        %v289 = vpop.permute.xlu0 %288
        %v291 = vmul.f32 %v286, %v289
        %vm292 = vcmp.eq.f32.partialorder %v286, 1.0
        %v293 = vsel %vm292, 1, 0
        %294 = vrot.lane.b32.xlu0 %v293, 127
        %v295 = vpop.permute.xlu0 %294
        %vm296 = vcmp.ne.s32.totalorder %v295, 0
        %vm297 = vmand %vm292, %vm296
        %v299 = vlaneseq
        %v300 = vshrl.u32 %v299, 7
        %v301 = vsub.s32 0, %v300
        %v302 = vrot.slane %v225, %v301
        %v303 = vlaneseq
        %v304 = vshrl.u32 %v303, 7
        %v305 = vsub.s32 1, %v304
        %v306 = vrot.slane %v225, %v305
        %309 = vset.pattern.permute.xlu0 2
        %310 = vperm.xlu0 %309, %v280
        %v311 = vpop.permute.xlu0 %310
        %v313 = vmin.f32 %v302, %v311
        %v314 = vmin.f32 %v306, %v311
        %v316 = vlaneseq
        %v317 = vshrl.u32 %v316, 7
        %v318 = vsub.s32 0, %v317
        %v319 = vrot.slane %v221, %v318
        %v320 = vlaneseq
        %v321 = vshrl.u32 %v320, 7
        %v322 = vsub.s32 1, %v321
        %v323 = vrot.slane %v221, %v322
        %326 = vset.pattern.permute.xlu0 0
        %327 = vperm.xlu0 %326, %v280
        %v328 = vpop.permute.xlu0 %327
        %v330 = vmax.f32 %v319, %v328
        %v331 = vmax.f32 %v323, %v328
        %v332 = vsub.f32 %v313, %v330
        %v333 = vsub.f32 %v314, %v331
        %v334 = vadd.f32 %v332, 1.0
        %v335 = vadd.f32 %v333, 1.0
        %v336 = vmax.f32 %v334, 0.0
        %v337 = vmax.f32 %v335, 0.0
        %v339 = vlaneseq
        %v340 = vshrl.u32 %v339, 7
        %v341 = vsub.s32 0, %v340
        %v342 = vrot.slane %v227, %v341
        %v343 = vlaneseq
        %v344 = vshrl.u32 %v343, 7
        %v345 = vsub.s32 1, %v344
        %v346 = vrot.slane %v227, %v345
        %349 = vset.pattern.permute.xlu0 3
        %350 = vperm.xlu0 %349, %v280
        %v351 = vpop.permute.xlu0 %350
        %v353 = vmin.f32 %v342, %v351
        %v354 = vmin.f32 %v346, %v351
        %v356 = vlaneseq
        %v357 = vshrl.u32 %v356, 7
        %v358 = vsub.s32 0, %v357
        %v359 = vrot.slane %v223, %v358
        %v360 = vlaneseq
        %v361 = vshrl.u32 %v360, 7
        %v362 = vsub.s32 1, %v361
        %v363 = vrot.slane %v223, %v362
        %366 = vset.pattern.permute.xlu0 1
        %367 = vperm.xlu0 %366, %v280
        %v368 = vpop.permute.xlu0 %367
        %v370 = vmax.f32 %v359, %v368
        %v371 = vmax.f32 %v363, %v368
        %v372 = vsub.f32 %v353, %v370
        %v373 = vsub.f32 %v354, %v371
        %v374 = vadd.f32 %v372, 1.0
        %v375 = vadd.f32 %v373, 1.0
        %v376 = vmax.f32 %v374, 0.0
        %v377 = vmax.f32 %v375, 0.0
        %v378 = vmul.f32 %v336, %v376
        %v379 = vmul.f32 %v337, %v377
        %v380 = vlaneseq
        %v381 = vshrl.u32 %v380, 7
        %v382 = vsub.s32 2, %v381
        %v383 = vrot.slane %v250, %v382
        %v384 = vlaneseq
        %v385 = vshrl.u32 %v384, 7
        %v386 = vsub.s32 2, %v385
        %v387 = vrot.slane %v251, %v386
        %389 = vset.pattern.permute.xlu0 2
        %390 = vperm.xlu0 %389, %v291
        %v391 = vpop.permute.xlu0 %390
        %v393 = vadd.f32 %v383, %v391
        %v394 = vadd.f32 %v387, %v391
        %v395 = vsub.f32 %v393, %v378
        %v396 = vsub.f32 %v394, %v379
        %v397 = vrcp.pop %v395
        %v398 = vrcp.pop %v396
        %v399 = vmul.f32 %v378, %v397
        %v400 = vmul.f32 %v379, %v398
        %v401 = vsel %vm297, 1, 0
        %402 = vset.pattern.permute.xlu0 2
        %403 = vperm.xlu0 %402, %v401
        %v404 = vpop.permute.xlu0 %403
        %vm405 = vcmp.eq.s32.totalorder %v404, 1
        %v406 = vsel %vm405, 0.0, %v399
        %v407 = vsel %vm405, 0.0, %v400
        %vm408 = vcmp.lt.f32.partialorder %v229, 0.5
        %v409 = vsel %vm408, 1, 0
        %v410 = vlaneseq
        %v411 = vshrl.u32 %v410, 7
        %v412 = vsub.s32 0, %v411
        %v413 = vrot.slane %v409, %v412
        %v414 = vlaneseq
        %v415 = vshrl.u32 %v414, 7
        %v416 = vsub.s32 1, %v415
        %v417 = vrot.slane %v409, %v416
        %vm418 = vcmp.ne.s32.totalorder %v413, 0
        %vm419 = vcmp.ne.s32.totalorder %v417, 0
        %vm420 = vmor %vm260, %vm418
        %vm421 = vmor %vm261, %vm419
        %v422 = vsel %vm420, 1, 0
        %v423 = vsel %vm421, 1, 0
        %v424 = vlaneseq
        %v425 = vshrl.u32 %v424, 7
        %v426 = vsub.s32 2, %v425
        %v427 = vrot.slane %v422, %v426
        %v428 = vlaneseq
        %v429 = vshrl.u32 %v428, 7
        %v430 = vsub.s32 2, %v429
        %v431 = vrot.slane %v423, %v430
        %vm432 = vcmp.eq.s32.totalorder %v427, 1
        %vm433 = vcmp.eq.s32.totalorder %v431, 1
        %v434 = vsel %vm432, -1.0, %v406
        %v435 = vsel %vm433, -1.0, %v407
        %v436 = vrot.slane %v434, 4
        %v437 = vmax.f32 %v434, %v436
        %v438 = vrot.slane %v437, 2
        %v439 = vmax.f32 %v437, %v438
        %v440 = vrot.slane %v439, 1
        %v441 = vmax.f32 %v439, %v440
        %v442 = vrot.slane %v435, 4
        %v443 = vmax.f32 %v435, %v442
        %v444 = vrot.slane %v443, 2
        %v445 = vmax.f32 %v443, %v444
        %v446 = vrot.slane %v445, 1
        %v447 = vmax.f32 %v445, %v446
        %v448 = vmax.f32 %v434, %v435
        %449 = vmax.xlane.f32.xlu0 %v448
        %v450 = vpop.xlane.xlu0 %449
        %vm451 = vcmp.eq.f32.partialorder %v450, 0.0
        %v452 = vsel %vm451, 1e-05, %v450
        %vm453 = vcmp.eq.f32.partialorder %v434, %v452
        %vm454 = vcmp.eq.f32.partialorder %v435, %v452
        %v455 = vsel %vm453, 1, 0
        %v456 = vsel %vm454, 1, 0
        %v457 = vcvt.s32.f32 %v455
        %v458 = vcvt.s32.f32 %v456
        %v459 = vrot.slane %v457, 4
        %v460 = vadd.f32 %v457, %v459
        %v461 = vrot.slane %v460, 2
        %v462 = vadd.f32 %v460, %v461
        %v463 = vrot.slane %v462, 1
        %v464 = vadd.f32 %v462, %v463
        %v465 = vrot.slane %v458, 4
        %v466 = vadd.f32 %v458, %v465
        %v467 = vrot.slane %v466, 2
        %v468 = vadd.f32 %v466, %v467
        %v469 = vrot.slane %v468, 1
        %v470 = vadd.f32 %v468, %v469
        %vm471 = vcmp.lt.f32.partialorder %v441, 0.3
        %vm472 = vcmp.lt.f32.partialorder %v447, 0.3
        %v473 = vsel %vm471, 0.0, -1.0
        %v474 = vsel %vm472, 0.0, -1.0
        %vm475 = vcmp.gt.f32.partialorder %v464, 0.0
        %vm476 = vcmp.gt.f32.partialorder %v470, 0.0
        %v477 = vsel %vm475, 1.0, %v473
        %v478 = vsel %vm476, 1.0, %v474
        %vm479 = vcmp.ge.f32.partialorder %v441, 0.7
        %vm480 = vcmp.ge.f32.partialorder %v447, 0.7
        %v481 = vsel %vm479, 1.0, %v477
        %v482 = vsel %vm480, 1.0, %v478
        %vm483 = vcmp.gt.f32.partialorder %v229, 0.5
        %v486 = vcombine.low %v481, %v482
        %v488 = vunpack.c.l.s4 1966171168
        %v489 = vunpack.c.0.s8 %v488
        %v490 = vlaneseq
        %v491 = vshrl.u32 %v490, 7
        %v492 = vsub.s32 %v489, %v491
        %v493 = vrot.slane %v486, %v492
        %v495 = vunpack.c.l.s4 1966171168
        %v496 = vunpack.c.0.s8 %v495
        %v497 = vlaneseq
        %v498 = vshrl.u32 %v497, 7
        %v499 = vsub.s32 %v496, %v498
        %v500 = vrot.slane %v493, %v499
        %v502 = vsel %vm483, %v500, -1.0
        %v503 = vlaneseq
        %vm504 = vcmp.ge.s32.totalorder %v503, 0
        %vm505 = vcmp.lt.s32.totalorder %v503, 256
        %vm506 = vmand %vm504, %vm505
        %507 = vst.msk [vmem:[%s205] sm:$0x3] %vm506, %v502
        %v508 = vlaneseq
        %v509 = vshrl.u32 %v508, 7
        %vm510 = vcmp.eq.f32.partialorder %v434, %v441
        %vm511 = vcmp.eq.f32.partialorder %v435, %v447
        %v512 = vsel %vm510, %v509, 8
        %v513 = vsel %vm511, %v509, 8
        %v514 = vrot.slane %v512, 4
        %vm515 = vcmp.lt.s32.totalorder %v512, %v514
        %v516 = vsel %vm515, %v512, %v514
        %v517 = vrot.slane %v516, 2
        %vm518 = vcmp.lt.s32.totalorder %v516, %v517
        %v519 = vsel %vm518, %v516, %v517
        %v520 = vrot.slane %v519, 1
        %vm521 = vcmp.lt.s32.totalorder %v519, %v520
        %v522 = vsel %vm521, %v519, %v520
        %v523 = vrot.slane %v513, 4
        %vm524 = vcmp.lt.s32.totalorder %v513, %v523
        %v525 = vsel %vm524, %v513, %v523
        %v526 = vrot.slane %v525, 2
        %vm527 = vcmp.lt.s32.totalorder %v525, %v526
        %v528 = vsel %vm527, %v525, %v526
        %v529 = vrot.slane %v528, 1
        %vm530 = vcmp.lt.s32.totalorder %v528, %v529
        %v531 = vsel %vm530, %v528, %v529
        %vm532 = vcmp.eq.s32.totalorder %v509, %v522
        %vm533 = vcmp.eq.s32.totalorder %v509, %v531
        %v534 = vsel %vm532, 1, 0
        %v535 = vsel %vm533, 1, 0
        %v536 = vcvt.s32.f32 %v534
        %v537 = vcvt.s32.f32 %v535
        %v538 = vld [vmem:[%s220] sm:$0xf]
        %vm539 = vcmask 64512
        %v541 = vsel %vm539, %v538, 0
        %543 = vmatprep.subr.mxu0 0.0
        %544 = vmatpush1.msra.mxu0 0.0
        %545 = vmatprep.subr.mxu0 0.0
        %546 = vmatpush1.msra.mxu0 0.0
        %547 = vmatprep.subr.mxu0 0.0
        %548 = vmatpush1.msra.mxu0 0.0
        %549 = vmatprep.subr.mxu0 0.0
        %550 = vmatpush1.msra.mxu0 0.0
        %551 = vmatprep.subr.mxu0 0.0
        %552 = vmatpush1.msra.mxu0 0.0
        %553 = vmatprep.subr.mxu0 0.0
        %554 = vmatpush1.msra.mxu0 0.0
        %555 = vmatprep.subr.mxu0 0.0
        %556 = vmatpush1.msra.mxu0 0.0
        %557 = vmatprep.subr.mxu0 0.0
        %558 = vmatpush1.msra.mxu0 0.0
        %559 = vmatprep.subr.mxu0 0.0
        %560 = vmatpush1.msra.mxu0 0.0
        %561 = vmatprep.subr.mxu0 0.0
        %562 = vmatpush1.msra.mxu0 0.0
        %563 = vmatprep.subr.mxu0 0.0
        %564 = vmatpush1.msra.mxu0 0.0
        %565 = vmatprep.subr.mxu0 0.0
        %566 = vmatpush1.msra.mxu0 0.0
        %567 = vmatprep.subr.mxu0 0.0
        %568 = vmatpush1.msra.mxu0 0.0
        %569 = vmatprep.subr.mxu0 0.0
        %570 = vmatpush1.msra.mxu0 0.0
        %571 = vmatprep.subr.mxu0 0.0
        %572 = vmatpush1.msra.mxu0 0.0
        %573 = vmatprep.subr.mxu0 %v537
        %574 = vmatpush1.msra.mxu0 %v536
        %575 = vmatprep.subr.mxu0 0.0
        %576 = vmatpush2.msra.mxu0 0.0
        %577 = vmatprep.subr.mxu0 0.0
        %578 = vmatpush2.msra.mxu0 0.0
        %579 = vmatprep.subr.mxu0 0.0
        %580 = vmatpush2.msra.mxu0 0.0
        %581 = vmatprep.subr.mxu0 0.0
        %582 = vmatpush2.msra.mxu0 0.0
        %583 = vmatprep.subr.mxu0 0.0
        %584 = vmatpush2.msra.mxu0 0.0
        %585 = vmatprep.subr.mxu0 0.0
        %586 = vmatpush2.msra.mxu0 0.0
        %587 = vmatprep.subr.mxu0 0.0
        %588 = vmatpush2.msra.mxu0 0.0
        %589 = vmatprep.subr.mxu0 0.0
        %590 = vmatpush2.msra.mxu0 0.0
        %591 = vmatprep.subr.mxu0 0.0
        %592 = vmatpush2.msra.mxu0 0.0
        %593 = vmatprep.subr.mxu0 0.0
        %594 = vmatpush2.msra.mxu0 0.0
        %595 = vmatprep.subr.mxu0 0.0
        %596 = vmatpush2.msra.mxu0 0.0
        %597 = vmatprep.subr.mxu0 0.0
        %598 = vmatpush2.msra.mxu0 0.0
        %599 = vmatprep.subr.mxu0 0.0
        %600 = vmatpush2.msra.mxu0 0.0
        %601 = vmatprep.subr.mxu0 0.0
        %602 = vmatpush2.msra.mxu0 0.0
        %603 = vmatprep.subr.mxu0 0.0
        %604 = vmatpush2.msra.mxu0 0.0
        %605 = vmatprep.subr.mxu0 0.0
        %606 = vmatpush2.msra.mxu0 0.0
        %607 = vmatprep.mubr.f32.mxu0 0.0
        %608 = vmatmul.mubr.f32.gmra.mxu0 %v541
        %v609 = vpop.f32.mrf.mxu0
        %v610 = vadd.f32 0.0, %v609
        %v611 = vpop.f32.mrf.mxu0
        %v612 = vadd.f32 0.0, %v611
        %613 = vdwg.mxu0
        %v616 = vrot.slane %v610, 6
        %v617 = vrot.slane %v612, 6
        %v620 = vsub.f32 %v610, %v616
        %v621 = vsub.f32 %v612, %v617
        %v622 = vadd.f32 %v620, 1.0
        %v623 = vadd.f32 %v621, 1.0
        %v624 = vmul.f32 %v622, 0.5
        %v625 = vmul.f32 %v623, 0.5
        %v628 = vrot.slane %v624, 2
        %v629 = vrot.slane %v625, 2
        %v632 = vadd.f32 %v610, %v628
        %v633 = vadd.f32 %v612, %v629
        %v634 = vrcp.pop %v266
        %v635 = vmul.f32 1.0, %v634
        %v636 = vrcp.pop %v267
        %v637 = vmul.f32 1.0, %v636
        %v638 = vsub.f32 %v632, %v278
        %v639 = vsub.f32 %v633, %v279
        %v642 = vrot.slane %v635, 2
        %v643 = vrot.slane %v637, 2
        %v646 = vmul.f32 %v638, %v642
        %v647 = vmul.f32 %v639, %v643
        %v648 = vmul.f32 %v622, %v635
        %v649 = vmul.f32 %v623, %v637
        %v650 = vlog2.pop %v648
        %v651 = vmul.f32 %v650, 0.6931472
        %v652 = vlog2.pop %v649
        %v653 = vmul.f32 %v652, 0.6931472
        %v654 = vsel %vm483, 1, 0
        %v655 = vlaneseq
        %v656 = vshrl.u32 %v655, 7
        %v657 = vsub.s32 0, %v656
        %v658 = vrot.slane %v654, %v657
        %v659 = vlaneseq
        %v660 = vshrl.u32 %v659, 7
        %v661 = vsub.s32 1, %v660
        %v662 = vrot.slane %v654, %v661
        %vm663 = vcmp.eq.s32.totalorder %v658, 1
        %vm664 = vcmp.eq.s32.totalorder %v662, 1
        %v665 = vsel %vm663, %v646, 0.0
        %v666 = vsel %vm664, %v647, 0.0
        %v669 = vcombine.low %v665, %v666
        %671 = vst [vmem:[%s212] sm:$0x33] %v669
        %v672 = vsel %vm663, %v651, 0.0
        %v673 = vsel %vm664, %v653, 0.0
        %v676 = vcombine.low %v672, %v673
        %678 = vst [vmem:[%s212] sm:$0xcc] %v676
        %s679 = sand.u32 %s103, 1
        %s680 = scalar_lea.sflag [#allocation3], %s679
        %s681 = sand.u32 %s103, 1
        %s682 = smul.addr %s681, 2
        %s683 = scalar_lea.vmem [#allocation2], %s682
        %s684 = sand.u32 %s129, 1
        %s685 = scalar_lea.sflag [#allocation5], %s684
        %s686 = sand.u32 %s129, 1
        %s687 = smul.addr %s686, 8
        %s688 = scalar_lea.vmem [#allocation4], %s687
        // Predicated region
        $region33: #{tpu_custom_call.1} parent=31 // pred_check
          %p689 = pneg %p113
        $region34: #{tpu_custom_call.1} parent=31 // pred_check_branch
          %691 = sbr.rel (%p689) target = $region36
        $region35: #{tpu_custom_call.1} parent=31 // pred_region
          %s693 = ssub.s32 32, 32
          %694 = vsyncadd %s680, %s693
          %s695 = smul.addr %s22, 2
          %s696 = smul.addr %s695, 16
          %s697 = scalar_lea.hbm %s3, %s696
          %s699 = sshll.u32 %s683, 4
          %s700 = int_to_ptr.vmem [resolvable:$true] %s699
          %702 = dma.vmem_to_hbm [thread:$0]  %s700, 32, %s697, %s680
        $region36: #{tpu_custom_call.1} parent=31 // pred_fallthru
          _
        // Predicated region
        $region37: #{tpu_custom_call.1} parent=31 // pred_check
          %p703 = pneg %p139
        $region38: #{tpu_custom_call.1} parent=31 // pred_check_branch
          %705 = sbr.rel (%p703) target = $region40
        $region39: #{tpu_custom_call.1} parent=31 // pred_region
          %s707 = ssub.s32 128, 128
          %708 = vsyncadd %s685, %s707
          %s709 = smul.addr %s22, 2
          %s710 = smul.addr %s709, 64
          %s711 = scalar_lea.hbm %s4, %s710
          %s713 = sshll.u32 %s688, 4
          %s714 = int_to_ptr.vmem [resolvable:$true] %s713
          %716 = dma.vmem_to_hbm [thread:$0]  %s714, 128, %s711, %s685
        $region40: #{tpu_custom_call.1} parent=31 // pred_fallthru
          _
      $region32: #{tpu_custom_call.1} parent=5 // pred_fallthru
        _
      %p717 = scmp.le.s32.totalorder 2, %s17
      // Predicated region
      $region41: #{tpu_custom_call.1} parent=5 // pred_check
        %p718 = pneg %p717
      $region42: #{tpu_custom_call.1} parent=5 // pred_check_branch
        %720 = sbr.rel (%p718) target = $region44
      $region43: #{tpu_custom_call.1} parent=5 // pred_region
        %s721 = ssub.s32 %s17, 2
        // Predicated region
        $region45: #{tpu_custom_call.1} parent=43 // pred_check
          %p722 = pneg %p119
        $region46: #{tpu_custom_call.1} parent=43 // pred_check_branch
          %724 = sbr.rel (%p722) target = $region48
        $region47: #{tpu_custom_call.1} parent=43 // pred_region
          %s725 = sand.u32 %s104, 1
          %s726 = scalar_lea.sflag [#allocation3], %s725
          %s727 = sand.u32 %s104, 1
          %s728 = smul.addr %s727, 2
          %s729 = scalar_lea.vmem [#allocation2], %s728
          %730 = dma.done %s726, 32
        $region48: #{tpu_custom_call.1} parent=43 // pred_fallthru
          _
        // Predicated region
        $region49: #{tpu_custom_call.1} parent=43 // pred_check
          %p731 = pneg %p145
        $region50: #{tpu_custom_call.1} parent=43 // pred_check_branch
          %733 = sbr.rel (%p731) target = $region52
        $region51: #{tpu_custom_call.1} parent=43 // pred_region
          %s734 = sand.u32 %s130, 1
          %s735 = scalar_lea.sflag [#allocation5], %s734
          %s736 = sand.u32 %s130, 1
          %s737 = smul.addr %s736, 8
          %s738 = scalar_lea.vmem [#allocation4], %s737
          %739 = dma.done %s735, 128
        $region52: #{tpu_custom_call.1} parent=43 // pred_fallthru
          _
      $region44: #{tpu_custom_call.1} parent=5 // pred_fallthru
        _
    $region6: #{tpu_custom_call.1} parent=1 // loop_footer
      %s21 = sadd.s32 1, %s17
    $region7: #{tpu_custom_call.1} parent=1 // loop_footer_branch
      %16 = sbr.rel target = $region3
    $region8: #{tpu_custom_call.1} parent=1 // loop_exit
      _
    %740 = vsyncpa [#allocation3], 1
    %s741 = scalar_lea.sflag [#allocation3], 1
    %742 = vsyncpa %s741, 1
    %743 = vsyncpa [#allocation5], 1
    %s744 = scalar_lea.sflag [#allocation5], 1
    %745 = vsyncpa %s744, 1

</llo_original>
